<compile_context>
chip_gen: v6e
topology: v6e:2x2x1
jax: 0.10.0
libtpu: 0.0.40
codegen_flags: <defaults>
</compile_context>

<pallas_src>
import functools

import jax
import jax.numpy as jnp
from jax.experimental import pallas as pl
from jax.experimental.pallas import tpu as pltpu

_MAX_UNROLL = 8  # bound on statically-unrolled per-slice transposes


def _block_budget_bytes() -> int:
    """Per-block VMEM budget (input block == output block for a permute).

    Live VMEM ~= 2 (double-buffer) x 2 (in + out) x budget; keep the total
    comfortably under the smallest scoped-VMEM default across generations
    (16 MiB v5e, 32 MiB v6e/v7x).  ~1 MiB blocks already reach ~85% of the
    HBM roofline, so larger slabs give only marginal gains.
    """
    try:
        cap = pltpu.get_tpu_info().vmem_capacity_bytes  # 128 MiB v5e/v6e, 64 MiB v7x
    except Exception:
        cap = 64 << 20
    return int(max(1 << 20, min(3 << 20, cap // 32)))


def _swap_kernel(x_ref, o_ref, *, perm, unroll_lead):
    ident = tuple(range(len(perm)))
    if perm == ident:
        # Leading-axis permutation only: realized purely by the BlockSpec
        # index maps (DMA re-index); the kernel body is a copy.
        o_ref[...] = x_ref[...]
    elif unroll_lead:
        # One batched leading axis (identity-positioned): statically unrolled
        # per-slice transposes keep the lowering on the plain minor-pair XLU
        # transpose path while amortizing per-grid-step overhead.
        inner = tuple(q - 1 for q in perm[1:])
        for i in range(x_ref.shape[0]):          # <= _MAX_UNROLL iterations
            o_ref[i] = jnp.transpose(x_ref[i], inner)
    else:
        o_ref[...] = jnp.transpose(x_ref[...], perm)  # XLU transpose of the tile


def swap_pallas(x, dims):
    """Pallas equivalent of `x.permute(dims)` (the Swap module's forward)."""
    ndim = x.ndim
    dims = tuple(int(d) % ndim for d in dims)
    assert sorted(dims) == list(range(ndim)), f"bad permutation {dims}"
    if ndim <= 1 or dims == tuple(range(ndim)):
        return x

    in_shape = tuple(x.shape)
    out_shape = tuple(in_shape[d] for d in dims)
    itemsize = jnp.dtype(x.dtype).itemsize
    budget = _block_budget_bytes()

    in_lane, in_sub = ndim - 1, ndim - 2
    out_lane, out_sub = dims[-1], dims[-2]
    sub_al = max(8, 32 // max(1, itemsize))   # packed sublane granularity

    # ---- resident input axes: input minor pair + output minor pair --------
    resident = sorted({in_lane, in_sub, out_lane, out_sub})

    def _align(ax):
        al = 1
        if ax == in_lane:
            al = max(al, 128)
        elif ax == in_sub:
            al = max(al, sub_al)
        if ax == out_lane:
            al = max(al, 128)
        elif ax == out_sub:
            al = max(al, sub_al)
        return al

    # ---- tile the resident axes so the SLAB (product) fits the budget -----
    tile = {ax: in_shape[ax] for ax in resident}

    def _blk_bytes():
        n = itemsize
        for ax in resident:
            n *= tile[ax]
        return n

    non_lane = sorted((ax for ax in resident if ax not in (in_lane, out_lane)),
                      key=lambda ax: -in_shape[ax])
    cut_order = non_lane + [ax for ax in (in_lane, out_lane) if ax in resident]
    _seen = set()
    cut_order = [a for a in cut_order if not (a in _seen or _seen.add(a))]
    for ax in cut_order:                      # cut non-lane axes first
        if _blk_bytes() <= budget:
            break
        al = _align(ax)
        per_unit = _blk_bytes() // tile[ax]
        t = max(al, (budget // max(1, per_unit)) // al * al)
        if t < in_shape[ax]:
            tile[ax] = t

    # ---- leading axes: grid (squeezed) or batched into the block ----------
    lead_pos = [p for p in range(ndim) if dims[p] not in resident]

    def _kernel_axes(kept_set):
        kin = [a for a in range(ndim) if a in kept_set]
        kout = [dims[p] for p in range(ndim) if dims[p] in kept_set]
        return kin, kout, tuple(kin.index(a) for a in kout)

    kept = set(resident)
    _, _, perm = _kernel_axes(kept)
    copy_only = perm == tuple(range(len(perm)))

    total_grid = 1
    for ax in resident:
        total_grid *= pl.cdiv(in_shape[ax], tile[ax])
    for p in lead_pos:
        total_grid *= in_shape[dims[p]]

    batch = {p: 1 for p in lead_pos}
    blk_bytes = _blk_bytes()
    swap_batched = False
    for p in sorted(lead_pos, reverse=True):  # innermost output axis first
        a, size = dims[p], in_shape[dims[p]]
        room = budget // max(1, blk_bytes)
        if not copy_only:
            room = min(room, _MAX_UNROLL)     # bounds the in-kernel unroll
        k = min(size, room)
        # Keep >=2 grid steps so both v7x TensorCores get a share of the work.
        if k >= 2 and total_grid >= 2 and (total_grid // size) * pl.cdiv(size, k) < 2:
            k = -(-size // 2)
        if k < 2:
            continue
        cand = kept | {a}
        ckin, ckout, cperm = _kernel_axes(cand)
        batched = [b for b in cand if b not in resident]
        ok = all(ckin.index(b) == ckout.index(b) for b in batched)
        if not copy_only:
            ok = ok and len(batched) == 1 and ckin[0] == a
        if not ok:
            continue
        kept, perm = cand, cperm
        batch[p] = k
        blk_bytes *= k
        total_grid = (total_grid // size) * pl.cdiv(size, k)
        swap_batched = swap_batched or not copy_only

    # ---- block shapes, grid and index maps ---------------------------------
    blk_of = {ax: tile[ax] for ax in resident}
    for p in lead_pos:
        blk_of[dims[p]] = batch[p]

    in_block = tuple(blk_of[a] if a in kept else None for a in range(ndim))
    out_block = tuple(blk_of[dims[p]] if dims[p] in kept else None
                      for p in range(ndim))

    grid_axes = [a for a in range(ndim) if blk_of[a] < in_shape[a]]
    grid_axes.sort(key=lambda a: dims.index(a))      # output-major HBM sweep

    if grid_axes:
        grid = tuple(pl.cdiv(in_shape[a], blk_of[a]) for a in grid_axes)

        def in_index_map(*g):
            idx = [0] * ndim
            for gi, a in enumerate(grid_axes):
                idx[a] = g[gi]
            return tuple(idx)

        def out_index_map(*g):
            idx = [0] * ndim
            for gi, a in enumerate(grid_axes):
                idx[dims.index(a)] = g[gi]
            return tuple(idx)
    else:
        grid = (1,)
        in_index_map = lambda *_: (0,) * ndim
        out_index_map = lambda *_: (0,) * ndim

    return pl.pallas_call(
        functools.partial(_swap_kernel, perm=perm, unroll_lead=swap_batched),
        out_shape=jax.ShapeDtypeStruct(out_shape, x.dtype),
        grid=grid,
        in_specs=[pl.BlockSpec(in_block, in_index_map)],
        out_specs=pl.BlockSpec(out_block, out_index_map),
        compiler_params=pltpu.CompilerParams(
            dimension_semantics=("parallel",) * len(grid)),
        cost_estimate=pl.CostEstimate(
            flops=0, transcendentals=0,
            bytes_accessed=2 * int(x.size) * itemsize),
    )(x)


def make_swap(*dims):
    """Factory mirroring Swap(*dims); returns a jitted forward fn."""
    return jax.jit(functools.partial(swap_pallas, dims=tuple(dims)))


if __name__ == "__main__":
    key = jax.random.PRNGKey(0)
    k1, k2, k3 = jax.random.split(key, 3)

    # Case 1: the WaveGAN usage, Swap(0, 2, 1): (B, C, L) -> (B, L, C).
    x1 = jax.random.normal(k1, (2, 128, 256), jnp.float32)
    y1 = jax.block_until_ready(make_swap(0, 2, 1)(x1))
    assert y1.shape == (2, 256, 128), y1.shape
    assert jnp.array_equal(y1, jnp.transpose(x1, (0, 2, 1)))

    # Case 2: rank-4 minor swap, Swap(0, 1, 3, 2); exercises the batched
    # leading-axis + unrolled per-slice transpose path.
    x2 = jax.random.normal(k2, (2, 4, 16, 128), jnp.float32)
    y2 = jax.block_until_ready(make_swap(0, 1, 3, 2)(x2))
    assert y2.shape == (2, 4, 128, 16), y2.shape
    assert jnp.array_equal(y2, jnp.transpose(x2, (0, 1, 3, 2)))

    # Case 3: leading-axis swap, Swap(1, 0, 2, 3) -> pure DMA re-index
    # (copy kernel) with a batched leading block.
    y3 = jax.block_until_ready(make_swap(1, 0, 2, 3)(x2))
    assert y3.shape == (4, 2, 16, 128), y3.shape
    assert jnp.array_equal(y3, jnp.transpose(x2, (1, 0, 2, 3)))

    # Case 4: plain rank-2 transpose (whole array resident, single grid step).
    x4 = jax.random.normal(k3, (64, 128), jnp.float32)
    y4 = jax.block_until_ready(make_swap(1, 0)(x4))
    assert y4.shape == (128, 64), y4.shape
    assert jnp.array_equal(y4, x4.T)

    print("KERNEL_OK")
</pallas_src>

<mosaic_0001>
module attributes {stable_mosaic.version = 11 : i64} {
  func.func @_swap_kernel(%arg0: i32, %arg1: memref<1x128x256xf32, #tpu.memory_space<vmem>>, %arg2: memref<1x256x128xf32, #tpu.memory_space<vmem>>) attributes {dimension_semantics = [#tpu.dimension_semantics<parallel>], iteration_bounds = array<i64: 2>, scalar_prefetch = 0 : i64, scratch_operands = 0 : i64, tpu.core_type = #tpu.core_type<tc>, window_params = [{transform_indices = @transform_0, window_bounds = array<i64: 1, 128, 256>}, {transform_indices = @transform_1, window_bounds = array<i64: 1, 256, 128>}]} {
    %c0 = arith.constant 0 : index
    %c0_0 = arith.constant 0 : index
    %c0_1 = arith.constant 0 : index
    %0 = vector.load %arg1[%c0, %c0_0, %c0_1] : memref<1x128x256xf32, #tpu.memory_space<vmem>>, vector<1x128x256xf32>
    %1 = vector.shape_cast %0 : vector<1x128x256xf32> to vector<128x256xf32>
    %2 = tpu.transpose %1, [1, 0] : vector<128x256xf32> -> vector<256x128xf32>
    %c0_2 = arith.constant 0 : index
    %c0_3 = arith.constant 0 : index
    %c0_4 = arith.constant 0 : index
    %3 = vector.load %arg2[%c0_2, %c0_3, %c0_4] : memref<1x256x128xf32, #tpu.memory_space<vmem>>, vector<1x256x128xf32>
    %4 = vector.shape_cast %3 : vector<1x256x128xf32> to vector<256x128xf32>
    %5 = vector.shape_cast %2 : vector<256x128xf32> to vector<1x256x128xf32>
    tpu.vector_store %arg2[%c0_2, %c0_3, %c0_4], %5 {strides = array<i32>} : memref<1x256x128xf32, #tpu.memory_space<vmem>>, vector<1x256x128xf32>,
    return
  }
  func.func @transform_0(%arg0: i32) -> (i32, i32, i32) {
    %c0_i32 = arith.constant 0 : i32
    %c0_i32_0 = arith.constant 0 : i32
    %c0_i32_1 = arith.constant 0 : i32
    return %arg0, %c0_i32, %c0_i32_0 : i32, i32, i32
  }
  func.func @transform_1(%arg0: i32) -> (i32, i32, i32) {
    %c0_i32 = arith.constant 0 : i32
    %c0_i32_0 = arith.constant 0 : i32
    %c0_i32_1 = arith.constant 0 : i32
    return %arg0, %c0_i32, %c0_i32_0 : i32, i32, i32
  }
}

</mosaic_0001>

<llo_original>
// kernel: swap_pallas.1
$region0: #{swap_pallas.1}
  #allocation0 [shape = 'u32[]', space=smem, size = 0x4, offset = 0x4, fixed_abs, tag = 'smem constant byte address 0x4 - core index']
  #allocation1 [shape = 'u32[144,128]{1,0:T(1,128)}', space=vmem, size = 0x12000, scoped, tag = 'internal scratch']
  %s0 = inlined_call_operand.hbm [shape: f32[2,128,256], index: 0, kind: input, shape index: {}]
  %s1 = inlined_call_operand.hbm [shape: f32[2,256,128], index: 1, kind: output, shape index: {}]
  %s2 = sld [smem:[#allocation0]]
  $region41: #{swap_pallas.1} parent=0
    _
  %s4 = ssub.s32 1, %s2
  %s5 = scalar_select 0, %s4, %s2
  $region1: #{swap_pallas.1} parent=0
    #allocation2 [shape = 'u8[262144]{0}', space=vmem, size = 0x40000, scoped, tag = 'input window, operand 0']
    #allocation3 [shape = 's32[2]{0}', space=sflag, size = 0x8, scoped, tag = 'scoped memory for swap_pallas.1']
    #allocation4 [shape = 's32[2]{0}', space=sflag, size = 0x8, scoped, tag = 'scoped memory for swap_pallas.1']
    #allocation5 [shape = 'u8[262144]{0}', space=vmem, size = 0x40000, scoped, tag = 'output window, operand 0']
    %6 = vsyncpa [#allocation3], 0
    %s7 = scalar_lea.sflag [#allocation3], 1
    %8 = vsyncpa %s7, 0
    %9 = vsyncpa [#allocation4], 0
    %s10 = scalar_lea.sflag [#allocation4], 1
    %11 = vsyncpa %s10, 0
    loop: start=0, step=1, limit=4
    $region2: #{swap_pallas.1} parent=1 // loop_pre_header
      _
    $region3: #{swap_pallas.1} parent=1 // loop_header
      %s13 = sphi 0, %s17
      %p14 = scmp.ge.s32.totalorder %s13, 4
      %s23 = sphi 0, %s25
      %s26 = sphi 0, %s23
      %s27 = sphi 0, %s26
      %s43 = sphi 0, %s27
      %s49 = sphi 0, %s51
      %s52 = sphi 0, %s49
      %s53 = sphi 0, %s52
      %s69 = sphi 0, %s53
    $region4: #{swap_pallas.1} parent=1 // loop_header_branch
      %16 = sbr.rel (%p14) target = $region8
    $region5: #{swap_pallas.1} parent=1 // loop_body
      %s18 = ssub.s32 %s13, 1
      %s19 = ssub.s32 %s13, 2
      %s20 = sadd.s32 %s13, 1
      %s21 = ssub.s32 %s13, %s20
      %p22 = scmp.eq.s32.totalorder %s21, 0
      %s24 = sadd.s32 %s23, 1
      %s25 = scalar_select %p22, %s23, %s24
      %p28 = pneg %p22
      %p29 = scmp.eq.s32.totalorder %s13, 1
      %p30 = por %p28, %p29
      %p31 = scmp.ne.s32.totalorder %s23, %s26
      %p32 = scmp.eq.s32.totalorder %s13, 0
      %p33 = por %p31, %p32
      %p34 = scmp.ne.s32.totalorder %s23, %s26
      %p35 = scmp.eq.s32.totalorder %s18, 1
      %p36 = por %p34, %p35
      %p37 = scmp.ne.s32.totalorder %s26, %s27
      %p38 = scmp.eq.s32.totalorder %s18, 0
      %p39 = por %p37, %p38
      %p40 = scmp.ne.s32.totalorder %s26, %s27
      %p41 = scmp.eq.s32.totalorder %s19, 1
      %p42 = por %p40, %p41
      %p44 = scmp.ne.s32.totalorder %s27, %s43
      %p45 = scmp.eq.s32.totalorder %s19, 0
      %p46 = por %p44, %p45
      %s47 = ssub.s32 %s13, %s20
      %p48 = scmp.eq.s32.totalorder %s47, 0
      %s50 = sadd.s32 %s49, 1
      %s51 = scalar_select %p48, %s49, %s50
      %p54 = pneg %p48
      %p55 = scmp.eq.s32.totalorder %s13, 1
      %p56 = por %p54, %p55
      %p57 = scmp.ne.s32.totalorder %s49, %s52
      %p58 = scmp.eq.s32.totalorder %s13, 0
      %p59 = por %p57, %p58
      %p60 = scmp.ne.s32.totalorder %s49, %s52
      %p61 = scmp.eq.s32.totalorder %s18, 1
      %p62 = por %p60, %p61
      %p63 = scmp.ne.s32.totalorder %s52, %s53
      %p64 = scmp.eq.s32.totalorder %s18, 0
      %p65 = por %p63, %p64
      %p66 = scmp.ne.s32.totalorder %s52, %s53
      %p67 = scmp.eq.s32.totalorder %s19, 1
      %p68 = por %p66, %p67
      %p70 = scmp.ne.s32.totalorder %s53, %s69
      %p71 = scmp.eq.s32.totalorder %s19, 0
      %p72 = por %p70, %p71
      %p73 = scmp.le.s32.totalorder 1, %s13
      %p74 = scmp.lt.s32.totalorder %s13, 3
      %p75 = pnand %p73, %p74
      %p76 = pneg %p75
      // Predicated region
      $region9: #{swap_pallas.1} parent=5 // pred_check
        _
      $region10: #{swap_pallas.1} parent=5 // pred_check_branch
        %78 = sbr.rel (%p75) target = $region12
      $region11: #{swap_pallas.1} parent=5 // pred_region
        %s79 = ssub.s32 %s13, 1
      $region12: #{swap_pallas.1} parent=5 // pred_fallthru
        _
      %p80 = scmp.lt.s32.totalorder %s13, 2
      // Predicated region
      $region13: #{swap_pallas.1} parent=5 // pred_check
        %p81 = pneg %p80
      $region14: #{swap_pallas.1} parent=5 // pred_check_branch
        %83 = sbr.rel (%p81) target = $region16
      $region15: #{swap_pallas.1} parent=5 // pred_region
        // Predicated region
        $region17: #{swap_pallas.1} parent=15 // pred_check
          %p84 = pneg %p33
        $region18: #{swap_pallas.1} parent=15 // pred_check_branch
          %86 = sbr.rel (%p84) target = $region20
        $region19: #{swap_pallas.1} parent=15 // pred_region
          %s87 = sand.u32 %s23, 1
          %s88 = scalar_lea.sflag [#allocation3], %s87
          %s89 = sand.u32 %s23, 1
          %s90 = smul.addr %s89, 256
          %s91 = scalar_lea.vmem [#allocation2], %s90
          %s93 = ssub.s32 4096, 4096
          %94 = vsyncadd %s88, %s93
          %s95 = smul.addr %s13, 32
          %s96 = smul.addr %s95, 128
          %s97 = scalar_lea.hbm %s0, %s96
          %s98 = sshll.u32 %s91, 4
          %s99 = int_to_ptr.vmem [resolvable:$true] %s98
          %104 = dma.hbm_to_vmem [thread:$0]  %s97, 4096, %s99, %s88, 256, 256, 16
        $region20: #{swap_pallas.1} parent=15 // pred_fallthru
          _
      $region16: #{swap_pallas.1} parent=5 // pred_fallthru
        _
      %p105 = scmp.le.s32.totalorder 1, %s13
      %p106 = scmp.lt.s32.totalorder %s13, 3
      %p107 = pnand %p105, %p106
      %p108 = pneg %p107
      // Predicated region
      $region21: #{swap_pallas.1} parent=5 // pred_check
        _
      $region22: #{swap_pallas.1} parent=5 // pred_check_branch
        %110 = sbr.rel (%p107) target = $region24
      $region23: #{swap_pallas.1} parent=5 // pred_region
        %s111 = ssub.s32 %s13, 1
        %s112 = sand.u32 %s26, 1
        %s113 = scalar_lea.sflag [#allocation3], %s112
        %s114 = sand.u32 %s26, 1
        %s115 = smul.addr %s114, 256
        %s116 = scalar_lea.vmem [#allocation2], %s115
        // Predicated region
        $region25: #{swap_pallas.1} parent=23 // pred_check
          %p117 = pneg %p39
        $region26: #{swap_pallas.1} parent=23 // pred_check_branch
          %119 = sbr.rel (%p117) target = $region28
        $region27: #{swap_pallas.1} parent=23 // pred_region
          %120 = dma.done %s113, 4096
        $region28: #{swap_pallas.1} parent=23 // pred_fallthru
          _
        %s121 = sand.u32 %s26, 1
        %s122 = scalar_lea.sflag [#allocation3], %s121
        %s123 = sand.u32 %s26, 1
        %s124 = smul.addr %s123, 256
        %s125 = scalar_lea.vmem [#allocation2], %s124
        %p126 = pneg %p39
        %p127 = pneg %p36
        %p128 = pneg %p65
        %p129 = pneg %p62
        %s130 = sand.u32 %s52, 1
        %s131 = scalar_lea.sflag [#allocation4], %s130
        %s132 = sand.u32 %s52, 1
        %s133 = smul.addr %s132, 256
        %s134 = scalar_lea.vmem [#allocation5], %s133
        %v135 = vld [vmem:[%s116] sm:$0xff]
        %v136 = vld [vmem:[%s116 + $0x8] sm:$0xff]
        %v137 = vld [vmem:[%s116 + $0x10] sm:$0xff]
        %v138 = vld [vmem:[%s116 + $0x18] sm:$0xff]
        %v139 = vld [vmem:[%s116 + $0x20] sm:$0xff]
        %v140 = vld [vmem:[%s116 + $0x28] sm:$0xff]
        %v141 = vld [vmem:[%s116 + $0x30] sm:$0xff]
        %v142 = vld [vmem:[%s116 + $0x38] sm:$0xff]
        %v143 = vld [vmem:[%s116 + $0x40] sm:$0xff]
        %v144 = vld [vmem:[%s116 + $0x48] sm:$0xff]
        %v145 = vld [vmem:[%s116 + $0x50] sm:$0xff]
        %v146 = vld [vmem:[%s116 + $0x58] sm:$0xff]
        %v147 = vld [vmem:[%s116 + $0x60] sm:$0xff]
        %v148 = vld [vmem:[%s116 + $0x68] sm:$0xff]
        %v149 = vld [vmem:[%s116 + $0x70] sm:$0xff]
        %v150 = vld [vmem:[%s116 + $0x78] sm:$0xff]
        %v151 = vld [vmem:[%s116 + $0x80] sm:$0xff]
        %v152 = vld [vmem:[%s116 + $0x88] sm:$0xff]
        %v153 = vld [vmem:[%s116 + $0x90] sm:$0xff]
        %v154 = vld [vmem:[%s116 + $0x98] sm:$0xff]
        %v155 = vld [vmem:[%s116 + $0xa0] sm:$0xff]
        %v156 = vld [vmem:[%s116 + $0xa8] sm:$0xff]
        %v157 = vld [vmem:[%s116 + $0xb0] sm:$0xff]
        %v158 = vld [vmem:[%s116 + $0xb8] sm:$0xff]
        %v159 = vld [vmem:[%s116 + $0xc0] sm:$0xff]
        %v160 = vld [vmem:[%s116 + $0xc8] sm:$0xff]
        %v161 = vld [vmem:[%s116 + $0xd0] sm:$0xff]
        %v162 = vld [vmem:[%s116 + $0xd8] sm:$0xff]
        %v163 = vld [vmem:[%s116 + $0xe0] sm:$0xff]
        %v164 = vld [vmem:[%s116 + $0xe8] sm:$0xff]
        %v165 = vld [vmem:[%s116 + $0xf0] sm:$0xff]
        %v166 = vld [vmem:[%s116 + $0xf8] sm:$0xff]
        %167 = vxpose.xlu0.b32.start [1/16] %v135, 128
        %168 = vxpose.xlu0.b32.cont [2/16] %v137, 128
        %169 = vxpose.xlu0.b32.cont [3/16] %v139, 128
        %170 = vxpose.xlu0.b32.cont [4/16] %v141, 128
        %171 = vxpose.xlu0.b32.cont [5/16] %v143, 128
        %172 = vxpose.xlu0.b32.cont [6/16] %v145, 128
        %173 = vxpose.xlu0.b32.cont [7/16] %v147, 128
        %174 = vxpose.xlu0.b32.cont [8/16] %v149, 128
        %175 = vxpose.xlu0.b32.cont [9/16] %v151, 128
        %176 = vxpose.xlu0.b32.cont [10/16] %v153, 128
        %177 = vxpose.xlu0.b32.cont [11/16] %v155, 128
        %178 = vxpose.xlu0.b32.cont [12/16] %v157, 128
        %179 = vxpose.xlu0.b32.cont [13/16] %v159, 128
        %180 = vxpose.xlu0.b32.cont [14/16] %v161, 128
        %181 = vxpose.xlu0.b32.cont [15/16] %v163, 128
        %182 = vxpose.xlu0.b32.end [16/16] %v165, 128
        %v183 = vpop.trf.xlu0
        %v184 = vpop.trf.xlu0
        %v185 = vpop.trf.xlu0
        %v186 = vpop.trf.xlu0
        %v187 = vpop.trf.xlu0
        %v188 = vpop.trf.xlu0
        %v189 = vpop.trf.xlu0
        %v190 = vpop.trf.xlu0
        %v191 = vpop.trf.xlu0
        %v192 = vpop.trf.xlu0
        %v193 = vpop.trf.xlu0
        %v194 = vpop.trf.xlu0
        %v195 = vpop.trf.xlu0
        %v196 = vpop.trf.xlu0
        %v197 = vpop.trf.xlu0
        %v198 = vpop.trf.xlu0
        %199 = vxpose.xlu0.b32.start [1/16] %v136, 128
        %200 = vxpose.xlu0.b32.cont [2/16] %v138, 128
        %201 = vxpose.xlu0.b32.cont [3/16] %v140, 128
        %202 = vxpose.xlu0.b32.cont [4/16] %v142, 128
        %203 = vxpose.xlu0.b32.cont [5/16] %v144, 128
        %204 = vxpose.xlu0.b32.cont [6/16] %v146, 128
        %205 = vxpose.xlu0.b32.cont [7/16] %v148, 128
        %206 = vxpose.xlu0.b32.cont [8/16] %v150, 128
        %207 = vxpose.xlu0.b32.cont [9/16] %v152, 128
        %208 = vxpose.xlu0.b32.cont [10/16] %v154, 128
        %209 = vxpose.xlu0.b32.cont [11/16] %v156, 128
        %210 = vxpose.xlu0.b32.cont [12/16] %v158, 128
        %211 = vxpose.xlu0.b32.cont [13/16] %v160, 128
        %212 = vxpose.xlu0.b32.cont [14/16] %v162, 128
        %213 = vxpose.xlu0.b32.cont [15/16] %v164, 128
        %214 = vxpose.xlu0.b32.end [16/16] %v166, 128
        %v215 = vpop.trf.xlu0
        %v216 = vpop.trf.xlu0
        %v217 = vpop.trf.xlu0
        %v218 = vpop.trf.xlu0
        %v219 = vpop.trf.xlu0
        %v220 = vpop.trf.xlu0
        %v221 = vpop.trf.xlu0
        %v222 = vpop.trf.xlu0
        %v223 = vpop.trf.xlu0
        %v224 = vpop.trf.xlu0
        %v225 = vpop.trf.xlu0
        %v226 = vpop.trf.xlu0
        %v227 = vpop.trf.xlu0
        %v228 = vpop.trf.xlu0
        %v229 = vpop.trf.xlu0
        %v230 = vpop.trf.xlu0
        %231 = vst [vmem:[%s134] sm:$0xff] %v183
        %232 = vst [vmem:[%s134 + $0x8] sm:$0xff] %v184
        %233 = vst [vmem:[%s134 + $0x10] sm:$0xff] %v185
        %234 = vst [vmem:[%s134 + $0x18] sm:$0xff] %v186
        %235 = vst [vmem:[%s134 + $0x20] sm:$0xff] %v187
        %236 = vst [vmem:[%s134 + $0x28] sm:$0xff] %v188
        %237 = vst [vmem:[%s134 + $0x30] sm:$0xff] %v189
        %238 = vst [vmem:[%s134 + $0x38] sm:$0xff] %v190
        %239 = vst [vmem:[%s134 + $0x40] sm:$0xff] %v191
        %240 = vst [vmem:[%s134 + $0x48] sm:$0xff] %v192
        %241 = vst [vmem:[%s134 + $0x50] sm:$0xff] %v193
        %242 = vst [vmem:[%s134 + $0x58] sm:$0xff] %v194
        %243 = vst [vmem:[%s134 + $0x60] sm:$0xff] %v195
        %244 = vst [vmem:[%s134 + $0x68] sm:$0xff] %v196
        %245 = vst [vmem:[%s134 + $0x70] sm:$0xff] %v197
        %246 = vst [vmem:[%s134 + $0x78] sm:$0xff] %v198
        %247 = vst [vmem:[%s134 + $0x80] sm:$0xff] %v215
        %248 = vst [vmem:[%s134 + $0x88] sm:$0xff] %v216
        %249 = vst [vmem:[%s134 + $0x90] sm:$0xff] %v217
        %250 = vst [vmem:[%s134 + $0x98] sm:$0xff] %v218
        %251 = vst [vmem:[%s134 + $0xa0] sm:$0xff] %v219
        %252 = vst [vmem:[%s134 + $0xa8] sm:$0xff] %v220
        %253 = vst [vmem:[%s134 + $0xb0] sm:$0xff] %v221
        %254 = vst [vmem:[%s134 + $0xb8] sm:$0xff] %v222
        %255 = vst [vmem:[%s134 + $0xc0] sm:$0xff] %v223
        %256 = vst [vmem:[%s134 + $0xc8] sm:$0xff] %v224
        %257 = vst [vmem:[%s134 + $0xd0] sm:$0xff] %v225
        %258 = vst [vmem:[%s134 + $0xd8] sm:$0xff] %v226
        %259 = vst [vmem:[%s134 + $0xe0] sm:$0xff] %v227
        %260 = vst [vmem:[%s134 + $0xe8] sm:$0xff] %v228
        %261 = vst [vmem:[%s134 + $0xf0] sm:$0xff] %v229
        %262 = vst [vmem:[%s134 + $0xf8] sm:$0xff] %v230
        %s263 = sand.u32 %s52, 1
        %s264 = scalar_lea.sflag [#allocation4], %s263
        %s265 = sand.u32 %s52, 1
        %s266 = smul.addr %s265, 256
        %s267 = scalar_lea.vmem [#allocation5], %s266
        // Predicated region
        $region29: #{swap_pallas.1} parent=23 // pred_check
          %p268 = pneg %p62
        $region30: #{swap_pallas.1} parent=23 // pred_check_branch
          %270 = sbr.rel (%p268) target = $region32
        $region31: #{swap_pallas.1} parent=23 // pred_region
          %s272 = ssub.s32 4096, 4096
          %273 = vsyncadd %s264, %s272
          %s274 = smul.addr %s18, 32
          %s275 = smul.addr %s274, 128
          %s276 = scalar_lea.hbm %s1, %s275
          %s277 = sshll.u32 %s267, 4
          %s278 = int_to_ptr.vmem [resolvable:$true] %s277
          %283 = dma.vmem_to_hbm [thread:$0]  %s278, 4096, %s276, %s264, 128, 128, 8
        $region32: #{swap_pallas.1} parent=23 // pred_fallthru
          _
      $region24: #{swap_pallas.1} parent=5 // pred_fallthru
        _
      %p284 = scmp.le.s32.totalorder 2, %s13
      // Predicated region
      $region33: #{swap_pallas.1} parent=5 // pred_check
        %p285 = pneg %p284
      $region34: #{swap_pallas.1} parent=5 // pred_check_branch
        %287 = sbr.rel (%p285) target = $region36
      $region35: #{swap_pallas.1} parent=5 // pred_region
        %s288 = ssub.s32 %s13, 2
        // Predicated region
        $region37: #{swap_pallas.1} parent=35 // pred_check
          %p289 = pneg %p68
        $region38: #{swap_pallas.1} parent=35 // pred_check_branch
          %291 = sbr.rel (%p289) target = $region40
        $region39: #{swap_pallas.1} parent=35 // pred_region
          %s292 = sand.u32 %s53, 1
          %s293 = scalar_lea.sflag [#allocation4], %s292
          %s294 = sand.u32 %s53, 1
          %s295 = smul.addr %s294, 256
          %s296 = scalar_lea.vmem [#allocation5], %s295
          %297 = dma.done %s293, 4096
        $region40: #{swap_pallas.1} parent=35 // pred_fallthru
          _
      $region36: #{swap_pallas.1} parent=5 // pred_fallthru
        _
    $region6: #{swap_pallas.1} parent=1 // loop_footer
      %s17 = sadd.s32 1, %s13
    $region7: #{swap_pallas.1} parent=1 // loop_footer_branch
      %12 = sbr.rel target = $region3
    $region8: #{swap_pallas.1} parent=1 // loop_exit
      _
    %298 = vsyncpa [#allocation3], 1
    %s299 = scalar_lea.sflag [#allocation3], 1
    %300 = vsyncpa %s299, 1
    %301 = vsyncpa [#allocation4], 1
    %s302 = scalar_lea.sflag [#allocation4], 1
    %303 = vsyncpa %s302, 1

</llo_original>
